<compile_context>
chip_gen: v6e
topology: v6e:2x2x1
jax: 0.10.0
libtpu: 0.0.40
codegen_flags: <defaults>
</compile_context>

<pallas_src>
import functools
import math

import jax
import jax.numpy as jnp
from jax.experimental import pallas as pl
from jax.experimental.pallas import tpu as pltpu

SQRT2 = math.sqrt(2.0)


def _round_up(x, m):
    return (x + m - 1) // m * m


# ----------------------------------------------------------------------------
# Chip-aware default tiling (arithmetic intensity of the kernel == token tile).
# ----------------------------------------------------------------------------
def _default_config():
    try:
        kind = jax.devices()[0].device_kind.lower()
    except Exception:
        kind = ""
    if "v7" in kind:       # 64 MiB VMEM/core, 2 TC/chip, ~310 FLOP/B roofline
        return dict(token_tile=512, i_tile=512,
                    vmem_limit_bytes=52 * 1024 * 1024, split_cores=True)
    if "v6" in kind:       # 918 TF/s vs 1.4 TB/s -> needs ~650 FLOP/B
        return dict(token_tile=1024, i_tile=1024,
                    vmem_limit_bytes=96 * 1024 * 1024, split_cores=False)
    if "v5" in kind:       # ~240 FLOP/B roofline, 128 MiB VMEM
        return dict(token_tile=512, i_tile=1024,
                    vmem_limit_bytes=80 * 1024 * 1024, split_cores=False)
    # Unknown chip: conservative settings that fit every generation.
    return dict(token_tile=512, i_tile=512,
                vmem_limit_bytes=52 * 1024 * 1024, split_cores=False)


# ----------------------------------------------------------------------------
# In-kernel math helpers (only ops with guaranteed Mosaic lowerings).
# ----------------------------------------------------------------------------
def _erf_inkernel(x):
    # Abramowitz & Stegun 7.1.26 rational approximation, |err| < 1.5e-7
    # (plus the approx-reciprocal error, still negligible next to bf16).
    a1, a2, a3, a4, a5 = (0.254829592, -0.284496736, 1.421413741,
                          -1.453152027, 1.061405429)
    p = 0.3275911
    sgn = jnp.where(x >= 0.0, 1.0, -1.0)
    ax = jnp.abs(x)
    t = pl.reciprocal(1.0 + p * ax, approx=True)   # EUP slot (free next to MXU)
    poly = ((((a5 * t + a4) * t + a3) * t + a2) * t + a1) * t
    return sgn * (1.0 - poly * jnp.exp(-ax * ax))


def _gelu_inkernel(x):
    # Exact-form (erf-based) GELU, matching transformers.GELUActivation.
    return 0.5 * x * (1.0 + _erf_inkernel(x / SQRT2))


def _gelu_host(x):
    return 0.5 * x * (1.0 + jax.scipy.special.erf(x / SQRT2))


# ----------------------------------------------------------------------------
# Pallas kernel
# ----------------------------------------------------------------------------
def phi_mlp_kernel(h_ref, w1_ref, b1_ref, w2_ref, b2_ref,
                   out_ref, stats_ref, *,
                   tokens_per_tile, n_valid_tokens, mask_tokens):
    j = pl.program_id(1)

    h = h_ref[...]                                                    # (TM, H) bf16
    # Pre-bias intermediate activations for this (token, I) chunk; f32 result.
    # TODO(synk): stats are computed from bf16 MXU operands, not the f32 matmul
    # of the PyTorch module; acceptable for calibration-style statistics.
    z = jnp.dot(h, w1_ref[...], preferred_element_type=jnp.float32)  # (TM, TI)

    # ---- per-(token-tile, I-chunk) partial stats of the pre-bias values ----
    if mask_tokens:
        row = (jax.lax.broadcasted_iota(jnp.int32, (z.shape[0], 1), 0)
               + pl.program_id(0) * tokens_per_tile)                 # (TM, 1)
        valid = row < n_valid_tokens
        z_sum = jnp.where(valid, z, 0.0)
        z_max = jnp.where(valid, z, -jnp.inf)
        z_min = jnp.where(valid, z, jnp.inf)
    else:
        z_sum = z_max = z_min = z
    stats_ref[0:1, :] = jnp.sum(z_sum, axis=0, keepdims=True)
    stats_ref[1:2, :] = jnp.sum(z_sum * z_sum, axis=0, keepdims=True)
    stats_ref[2:3, :] = jnp.max(z_max, axis=0, keepdims=True)
    stats_ref[3:4, :] = jnp.min(z_min, axis=0, keepdims=True)

    # ---- GELU-MLP path; accumulate directly into the resident output block ----
    a = _gelu_inkernel(z + b1_ref[...])                               # (TM, TI) f32
    part = jnp.dot(a.astype(w2_ref.dtype), w2_ref[...],
                   preferred_element_type=jnp.float32)                # (TM, H) f32

    @pl.when(j == 0)
    def _():
        out_ref[...] = jnp.broadcast_to(b2_ref[...], out_ref.shape)

    out_ref[...] += part


# ----------------------------------------------------------------------------
# One-time weight layout preparation (hoisted out of the per-call path).
# ----------------------------------------------------------------------------
def prepare_weights(fc1_w, fc1_b, fc2_w, fc2_b, *, i_tile,
                    mxu_dtype=jnp.bfloat16):
    I, H = fc1_w.shape
    if I > i_tile:
        assert i_tile % 128 == 0, "i_tile must be a multiple of 128"
        TI = i_tile
    else:
        TI = I
    I_pad = _round_up(I, TI)
    nI = I_pad // TI

    w1_t = jnp.pad(fc1_w.T.astype(jnp.float32), ((0, 0), (0, I_pad - I)))
    # Contiguous (nI, H, TI) chunk layout -> each fc1 chunk DMA is one
    # contiguous slab instead of H strided segments of a column slab.
    w1_chunks = w1_t.reshape(H, nI, TI).transpose(1, 0, 2).astype(mxu_dtype)
    b1 = jnp.pad(fc1_b.astype(jnp.float32), (0, I_pad - I))[None, :]
    # fc2^T row slabs are already contiguous when blocked (TI, H).
    w2_t = jnp.pad(fc2_w.T.astype(jnp.float32),
                   ((0, I_pad - I), (0, 0))).astype(mxu_dtype)
    b2 = fc2_b.astype(jnp.float32)[None, :]
    return dict(w1_chunks=w1_chunks, b1=b1, w2_t=w2_t, b2=b2,
                I=I, H=H, TI=TI, nI=nI, I_pad=I_pad)


# ----------------------------------------------------------------------------
# Jitted forward (one cast pass over the activations; everything else fused).
# ----------------------------------------------------------------------------
def _phi_mlp_call(hidden_states, w1_chunks, b1, w2_t, b2, *,
                  TM, TI, i_valid, vmem_limit_bytes, mxu_dtype):
    orig_shape = hidden_states.shape
    H = orig_shape[-1]
    h = hidden_states.reshape(-1, H).astype(mxu_dtype)   # single activation pass
    n_valid = h.shape[0]
    N8 = _round_up(n_valid, 8)
    if N8 != n_valid:                                     # tiny (< 8 rows) pad
        h = jnp.pad(h, ((0, N8 - n_valid), (0, 0)))

    nI = w1_chunks.shape[0]
    I_pad = nI * TI
    T = pl.cdiv(N8, TM)
    mask_tokens = (T * TM != n_valid)

    kernel = functools.partial(
        phi_mlp_kernel, tokens_per_tile=TM, n_valid_tokens=n_valid,
        mask_tokens=mask_tokens)

    out, stats = pl.pallas_call(
        kernel,
        out_shape=(jax.ShapeDtypeStruct((N8, H), jnp.float32),
                   jax.ShapeDtypeStruct((T, 4, I_pad), jnp.float32)),
        grid_spec=pltpu.PrefetchScalarGridSpec(
            num_scalar_prefetch=0,
            grid=(T, nI),
            in_specs=[
                pl.BlockSpec((TM, H), lambda i, j: (i, 0)),        # tokens (resident over j)
                pl.BlockSpec((None, H, TI), lambda i, j: (j, 0, 0)),  # fc1^T chunk (contiguous)
                pl.BlockSpec((1, TI), lambda i, j: (0, j)),        # fc1 bias chunk
                pl.BlockSpec((TI, H), lambda i, j: (j, 0)),        # fc2^T chunk (contiguous)
                pl.BlockSpec((1, H), lambda i, j: (0, 0)),         # fc2 bias
            ],
            out_specs=[
                pl.BlockSpec((TM, H), lambda i, j: (i, 0)),        # output == accumulator
                pl.BlockSpec((None, 4, TI), lambda i, j: (i, 0, j)),  # packed stats
            ],
        ),
        compiler_params=pltpu.CompilerParams(
            dimension_semantics=("parallel", "arbitrary"),
            vmem_limit_bytes=vmem_limit_bytes),
    )(h, w1_chunks, b1, w2_t, b2)

    output = out[:n_valid].reshape(orig_shape)
    s = stats[:, :, :i_valid]
    return (output,
            jnp.sum(s[:, 0, :], axis=0),
            jnp.sum(s[:, 1, :], axis=0),
            jnp.max(s[:, 2, :], axis=0),
            jnp.min(s[:, 3, :], axis=0))


# ----------------------------------------------------------------------------
# Stateful wrapper mirroring PhiMLP_ (running intermediate-activation stats).
# ----------------------------------------------------------------------------
class PhiMLPPallas:

    def __init__(self, fc1_w, fc1_b, fc2_w, fc2_b, layer_index=0,
                 token_tile=None, i_tile=None, vmem_limit_bytes=None,
                 mxu_dtype=jnp.bfloat16):
        cfg = _default_config()
        self.token_tile = token_tile if token_tile is not None else cfg["token_tile"]
        self.i_tile = i_tile if i_tile is not None else cfg["i_tile"]
        self.vmem_limit_bytes = (vmem_limit_bytes if vmem_limit_bytes is not None
                                 else cfg["vmem_limit_bytes"])
        self.split_cores = cfg["split_cores"]
        self.mxu_dtype = mxu_dtype

        self.intermediate_size, self.hidden_size = fc1_w.shape
        self.layer_index = layer_index

        # Weight layout prep hoisted to construction time (transpose / pad /
        # cast / chunk once; ~100+ MB of per-call HBM traffic saved at Phi size).
        prep = prepare_weights(fc1_w, fc1_b, fc2_w, fc2_b,
                               i_tile=self.i_tile, mxu_dtype=mxu_dtype)
        self.w1_chunks = prep["w1_chunks"]
        self.b1 = prep["b1"]
        self.w2_t = prep["w2_t"]
        self.b2 = prep["b2"]
        self.TI = prep["TI"]

        self._jitted = jax.jit(
            _phi_mlp_call,
            static_argnames=("TM", "TI", "i_valid", "vmem_limit_bytes",
                             "mxu_dtype"))

        self.batch_num = 0
        self.hidden_states_intermediate_mean = 0.0
        self.hidden_states_intermediate_square_mean = 0.0
        self.hidden_states_intermediate_std = None
        self.hidden_states_intermediate_max = None
        self.hidden_states_intermediate_min = None
        # TODO(synk): the original module's print(layer_index)/print(batch_num)
        # debug side effects are intentionally omitted.

    def _choose_tm(self, n_tokens):
        n8 = _round_up(max(n_tokens, 1), 8)
        tm = _round_up(min(self.token_tile, n8), 8)
        # v7x: keep at least 2 token tiles so both TensorCores get work.
        if self.split_cores and n8 > 8 and pl.cdiv(n8, tm) < 2:
            tm = _round_up(pl.cdiv(n8, 2), 8)
        return tm

    def __call__(self, hidden_states):
        self.batch_num += 1
        n = self.batch_num

        n_tokens = 1
        for d in hidden_states.shape[:-1]:
            n_tokens *= d
        TM = self._choose_tm(n_tokens)

        output, s_sum, s_sumsq, s_max, s_min = self._jitted(
            hidden_states, self.w1_chunks, self.b1, self.w2_t, self.b2,
            TM=TM, TI=self.TI, i_valid=self.intermediate_size,
            vmem_limit_bytes=self.vmem_limit_bytes, mxu_dtype=self.mxu_dtype)

        batch_mean = s_sum / n_tokens
        batch_sq_mean = s_sumsq / n_tokens
        self.hidden_states_intermediate_mean = (
            (n - 1) / n * self.hidden_states_intermediate_mean + batch_mean / n)
        self.hidden_states_intermediate_square_mean = (
            (n - 1) / n * self.hidden_states_intermediate_square_mean
            + batch_sq_mean / n)
        self.hidden_states_intermediate_std = jnp.sqrt(
            self.hidden_states_intermediate_square_mean
            - self.hidden_states_intermediate_mean ** 2)
        if self.hidden_states_intermediate_max is None:
            self.hidden_states_intermediate_max = s_max
        else:
            self.hidden_states_intermediate_max = jnp.maximum(
                self.hidden_states_intermediate_max, s_max)
        if self.hidden_states_intermediate_min is None:
            self.hidden_states_intermediate_min = s_min
        else:
            self.hidden_states_intermediate_min = jnp.minimum(
                self.hidden_states_intermediate_min, s_min)
        return output


# ----------------------------------------------------------------------------
# Pure-JAX reference (mirrors the PyTorch forward exactly, in float32).
# ----------------------------------------------------------------------------
def reference_forward(hidden_states, fc1_w, fc1_b, fc2_w, fc2_b):
    H = hidden_states.shape[-1]
    x = hidden_states.reshape(-1, H).astype(jnp.float32)
    z = x @ fc1_w.T                                     # pre-bias intermediate
    out = _gelu_host(z + fc1_b[None, :]) @ fc2_w.T + fc2_b[None, :]
    stats = dict(count=x.shape[0], sum=z.sum(0), sumsq=(z * z).sum(0),
                 max=z.max(0), min=z.min(0))
    return out.reshape(hidden_states.shape), stats


if __name__ == "__main__":
    # Small shapes consistent with the module.
    B, S, H, I = 2, 8, 32, 64

    key = jax.random.PRNGKey(0)
    k1, k2, k3, k4, kx = jax.random.split(key, 5)
    fc1_w = jax.random.normal(k1, (I, H), jnp.float32) * 0.05
    fc1_b = jax.random.normal(k2, (I,), jnp.float32) * 0.05
    fc2_w = jax.random.normal(k3, (H, I), jnp.float32) * 0.05
    fc2_b = jax.random.normal(k4, (H,), jnp.float32) * 0.05
    hidden_states = jax.random.normal(kx, (B, S, H), jnp.float32)

    mlp = PhiMLPPallas(fc1_w, fc1_b, fc2_w, fc2_b, layer_index=0)
    out = mlp(hidden_states)
    out = jax.block_until_ready(out)

    ref_out, ref_stats = reference_forward(hidden_states, fc1_w, fc1_b,
                                           fc2_w, fc2_b)
    n_tok = B * S

    assert out.shape == (B, S, H)
    # bf16 MXU operands with f32 accumulation -> loose-ish tolerance vs f32 ref.
    assert jnp.allclose(out, ref_out, rtol=2e-2, atol=2e-3), (
        float(jnp.max(jnp.abs(out - ref_out))))
    assert jnp.allclose(mlp.hidden_states_intermediate_mean,
                        ref_stats["sum"] / n_tok, rtol=2e-2, atol=3e-3)
    assert jnp.allclose(mlp.hidden_states_intermediate_square_mean,
                        ref_stats["sumsq"] / n_tok, rtol=2e-2, atol=3e-3)
    assert jnp.allclose(mlp.hidden_states_intermediate_max,
                        ref_stats["max"], rtol=2e-2, atol=3e-3)
    assert jnp.allclose(mlp.hidden_states_intermediate_min,
                        ref_stats["min"], rtol=2e-2, atol=3e-3)
    print("KERNEL_OK")
</pallas_src>

<mosaic_0001>
module attributes {stable_mosaic.version = 11 : i64} {
  func.func @phi_mlp_kernel(%arg0: i32, %arg1: i32, %arg2: memref<16x32xbf16, #tpu.memory_space<vmem>>, %arg3: memref<1x32x64xbf16, #tpu.memory_space<vmem>>, %arg4: memref<1x64xf32, #tpu.memory_space<vmem>>, %arg5: memref<64x32xbf16, #tpu.memory_space<vmem>>, %arg6: memref<1x32xf32, #tpu.memory_space<vmem>>, %arg7: memref<16x32xf32, #tpu.memory_space<vmem>>, %arg8: memref<1x4x64xf32, #tpu.memory_space<vmem>>) attributes {dimension_semantics = [#tpu.dimension_semantics<parallel>, #tpu.dimension_semantics<arbitrary>], iteration_bounds = array<i64: 1, 1>, scalar_prefetch = 0 : i64, scratch_operands = 0 : i64, tpu.core_type = #tpu.core_type<tc>, window_params = [{transform_indices = @transform_0, window_bounds = array<i64: 16, 32>}, {transform_indices = @transform_1, window_bounds = array<i64: 1, 32, 64>}, {transform_indices = @transform_2, window_bounds = array<i64: 1, 64>}, {transform_indices = @transform_3, window_bounds = array<i64: 64, 32>}, {pipeline_mode = #tpu.pipeline_mode<synchronous>, transform_indices = @transform_4, window_bounds = array<i64: 1, 32>}, {transform_indices = @transform_5, window_bounds = array<i64: 16, 32>}, {transform_indices = @transform_6, window_bounds = array<i64: 1, 4, 64>}]} {
    %c0 = arith.constant 0 : index
    %c0_0 = arith.constant 0 : index
    %0 = vector.load %arg2[%c0, %c0_0] : memref<16x32xbf16, #tpu.memory_space<vmem>>, vector<16x32xbf16>
    %c0_1 = arith.constant 0 : index
    %c0_2 = arith.constant 0 : index
    %c0_3 = arith.constant 0 : index
    %1 = vector.load %arg3[%c0_1, %c0_2, %c0_3] : memref<1x32x64xbf16, #tpu.memory_space<vmem>>, vector<1x32x64xbf16>
    %2 = vector.shape_cast %1 : vector<1x32x64xbf16> to vector<32x64xbf16>
    %cst = arith.constant dense<0.000000e+00> : vector<16x64xf32>
    %3 = tpu.matmul %0, %2, %cst {dimension_numbers = #tpu.dot_dimension_numbers<[1], [0], [0], [1], [0, 0, 1, 1], [], []>} : vector<16x32xbf16>, vector<32x64xbf16>, vector<16x64xf32> -> vector<16x64xf32>
    %cst_4 = arith.constant dense<0.000000e+00> : vector<64xf32>
    %4 = vector.multi_reduction <add>, %3, %cst_4 [0] : vector<16x64xf32> to vector<64xf32>
    %5 = vector.shape_cast %4 : vector<64xf32> to vector<1x64xf32>
    %c0_5 = arith.constant 0 : index
    %c0_6 = arith.constant 0 : index
    %c0_7 = arith.constant 0 : index
    %6 = vector.load %arg8[%c0_5, %c0_6, %c0_7] : memref<1x4x64xf32, #tpu.memory_space<vmem>>, vector<1x1x64xf32>
    %7 = vector.shape_cast %6 : vector<1x1x64xf32> to vector<1x64xf32>
    %8 = vector.shape_cast %5 : vector<1x64xf32> to vector<1x1x64xf32>
    tpu.vector_store %arg8[%c0_5, %c0_6, %c0_7], %8 {strides = array<i32>} : memref<1x4x64xf32, #tpu.memory_space<vmem>>, vector<1x1x64xf32>,
    %9 = arith.mulf %3, %3 : vector<16x64xf32>
    %cst_8 = arith.constant dense<0.000000e+00> : vector<64xf32>
    %10 = vector.multi_reduction <add>, %9, %cst_8 [0] : vector<16x64xf32> to vector<64xf32>
    %11 = vector.shape_cast %10 : vector<64xf32> to vector<1x64xf32>
    %c0_9 = arith.constant 0 : index
    %c1 = arith.constant 1 : index
    %c0_10 = arith.constant 0 : index
    %12 = vector.load %arg8[%c0_9, %c1, %c0_10] : memref<1x4x64xf32, #tpu.memory_space<vmem>>, vector<1x1x64xf32>
    %13 = vector.shape_cast %12 : vector<1x1x64xf32> to vector<1x64xf32>
    %14 = vector.shape_cast %11 : vector<1x64xf32> to vector<1x1x64xf32>
    tpu.vector_store %arg8[%c0_9, %c1, %c0_10], %14 {strides = array<i32>} : memref<1x4x64xf32, #tpu.memory_space<vmem>>, vector<1x1x64xf32>,
    %cst_11 = arith.constant dense<0xFF800000> : vector<64xf32>
    %15 = vector.multi_reduction <maximumf>, %3, %cst_11 [0] : vector<16x64xf32> to vector<64xf32>
    %16 = vector.shape_cast %15 : vector<64xf32> to vector<1x64xf32>
    %c0_12 = arith.constant 0 : index
    %c2 = arith.constant 2 : index
    %c0_13 = arith.constant 0 : index
    %17 = vector.load %arg8[%c0_12, %c2, %c0_13] : memref<1x4x64xf32, #tpu.memory_space<vmem>>, vector<1x1x64xf32>
    %18 = vector.shape_cast %17 : vector<1x1x64xf32> to vector<1x64xf32>
    %19 = vector.shape_cast %16 : vector<1x64xf32> to vector<1x1x64xf32>
    tpu.vector_store %arg8[%c0_12, %c2, %c0_13], %19 {strides = array<i32>} : memref<1x4x64xf32, #tpu.memory_space<vmem>>, vector<1x1x64xf32>,
    %cst_14 = arith.constant dense<0x7F800000> : vector<64xf32>
    %20 = vector.multi_reduction <minimumf>, %3, %cst_14 [0] : vector<16x64xf32> to vector<64xf32>
    %21 = vector.shape_cast %20 : vector<64xf32> to vector<1x64xf32>
    %c0_15 = arith.constant 0 : index
    %c3 = arith.constant 3 : index
    %c0_16 = arith.constant 0 : index
    %22 = vector.load %arg8[%c0_15, %c3, %c0_16] : memref<1x4x64xf32, #tpu.memory_space<vmem>>, vector<1x1x64xf32>
    %23 = vector.shape_cast %22 : vector<1x1x64xf32> to vector<1x64xf32>
    %24 = vector.shape_cast %21 : vector<1x64xf32> to vector<1x1x64xf32>
    tpu.vector_store %arg8[%c0_15, %c3, %c0_16], %24 {strides = array<i32>} : memref<1x4x64xf32, #tpu.memory_space<vmem>>, vector<1x1x64xf32>,
    %c0_17 = arith.constant 0 : index
    %c0_18 = arith.constant 0 : index
    %25 = vector.load %arg4[%c0_17, %c0_18] : memref<1x64xf32, #tpu.memory_space<vmem>>, vector<1x64xf32>
    %26 = vector.broadcast %25 : vector<1x64xf32> to vector<16x64xf32>
    %27 = arith.addf %3, %26 : vector<16x64xf32>
    %cst_19 = arith.constant 5.000000e-01 : f32
    %28 = vector.broadcast %cst_19 : f32 to vector<16x64xf32>
    %29 = arith.mulf %28, %27 : vector<16x64xf32>
    %cst_20 = arith.constant 1.41421354 : f32
    %30 = vector.broadcast %cst_20 : f32 to vector<16x64xf32>
    %31 = arith.divf %27, %30 : vector<16x64xf32>
    %cst_21 = arith.constant 0.000000e+00 : f32
    %32 = vector.broadcast %cst_21 : f32 to vector<16x64xf32>
    %33 = arith.cmpf oge, %31, %32 : vector<16x64xf32>
    %cst_22 = arith.constant 1.000000e+00 : f32
    %cst_23 = arith.constant -1.000000e+00 : f32
    %34 = vector.broadcast %cst_22 : f32 to vector<16x64xf32>
    %35 = vector.broadcast %cst_23 : f32 to vector<16x64xf32>
    %36 = arith.select %33, %34, %35 : vector<16x64xi1>, vector<16x64xf32>
    %37 = math.absf %31 : vector<16x64xf32>
    %cst_24 = arith.constant 0.327591091 : f32
    %38 = vector.broadcast %cst_24 : f32 to vector<16x64xf32>
    %39 = arith.mulf %38, %37 : vector<16x64xf32>
    %cst_25 = arith.constant 1.000000e+00 : f32
    %40 = vector.broadcast %cst_25 : f32 to vector<16x64xf32>
    %41 = arith.addf %40, %39 : vector<16x64xf32>
    %42 = tpu.reciprocal %41 {approx = true} : vector<16x64xf32> -> vector<16x64xf32>
    %cst_26 = arith.constant 1.06140542 : f32
    %43 = vector.broadcast %cst_26 : f32 to vector<16x64xf32>
    %44 = arith.mulf %43, %42 : vector<16x64xf32>
    %cst_27 = arith.constant -1.45315206 : f32
    %45 = vector.broadcast %cst_27 : f32 to vector<16x64xf32>
    %46 = arith.addf %44, %45 : vector<16x64xf32>
    %47 = arith.mulf %46, %42 : vector<16x64xf32>
    %cst_28 = arith.constant 1.42141378 : f32
    %48 = vector.broadcast %cst_28 : f32 to vector<16x64xf32>
    %49 = arith.addf %47, %48 : vector<16x64xf32>
    %50 = arith.mulf %49, %42 : vector<16x64xf32>
    %cst_29 = arith.constant -0.284496725 : f32
    %51 = vector.broadcast %cst_29 : f32 to vector<16x64xf32>
    %52 = arith.addf %50, %51 : vector<16x64xf32>
    %53 = arith.mulf %52, %42 : vector<16x64xf32>
    %cst_30 = arith.constant 0.254829586 : f32
    %54 = vector.broadcast %cst_30 : f32 to vector<16x64xf32>
    %55 = arith.addf %53, %54 : vector<16x64xf32>
    %56 = arith.mulf %55, %42 : vector<16x64xf32>
    %cst_31 = arith.constant 0.000000e+00 : f32
    %57 = vector.broadcast %cst_31 : f32 to vector<16x64xf32>
    %58 = arith.subf %57, %37 : vector<16x64xf32>
    %59 = arith.mulf %58, %37 : vector<16x64xf32>
    %60 = math.exp %59 : vector<16x64xf32>
    %61 = arith.mulf %56, %60 : vector<16x64xf32>
    %cst_32 = arith.constant 1.000000e+00 : f32
    %62 = vector.broadcast %cst_32 : f32 to vector<16x64xf32>
    %63 = arith.subf %62, %61 : vector<16x64xf32>
    %64 = arith.mulf %36, %63 : vector<16x64xf32>
    %cst_33 = arith.constant 1.000000e+00 : f32
    %65 = vector.broadcast %cst_33 : f32 to vector<16x64xf32>
    %66 = arith.addf %65, %64 : vector<16x64xf32>
    %67 = arith.mulf %29, %66 : vector<16x64xf32>
    %68 = arith.truncf %67 : vector<16x64xf32> to vector<16x64xbf16>
    %c0_34 = arith.constant 0 : index
    %c0_35 = arith.constant 0 : index
    %69 = vector.load %arg5[%c0_34, %c0_35] : memref<64x32xbf16, #tpu.memory_space<vmem>>, vector<64x32xbf16>
    %cst_36 = arith.constant dense<0.000000e+00> : vector<16x32xf32>
    %70 = tpu.matmul %68, %69, %cst_36 {dimension_numbers = #tpu.dot_dimension_numbers<[1], [0], [0], [1], [0, 0, 1, 1], [], []>} : vector<16x64xbf16>, vector<64x32xbf16>, vector<16x32xf32> -> vector<16x32xf32>
    %c0_i32 = arith.constant 0 : i32
    %71 = arith.cmpi eq, %arg1, %c0_i32 : i32
    %72 = arith.extui %71 : i1 to i32
    %c0_i32_37 = arith.constant 0 : i32
    %73 = arith.cmpi ne, %72, %c0_i32_37 : i32
    scf.if %73 {
      %c0_42 = arith.constant 0 : index
      %c0_43 = arith.constant 0 : index
      %77 = vector.load %arg6[%c0_42, %c0_43] : memref<1x32xf32, #tpu.memory_space<vmem>>, vector<1x32xf32>
      %78 = vector.shape_cast %77 : vector<1x32xf32> to vector<1x32xf32>
      %79 = vector.broadcast %78 : vector<1x32xf32> to vector<16x32xf32>
      %c0_44 = arith.constant 0 : index
      %c0_45 = arith.constant 0 : index
      %80 = vector.load %arg7[%c0_44, %c0_45] : memref<16x32xf32, #tpu.memory_space<vmem>>, vector<16x32xf32>
      tpu.vector_store %arg7[%c0_44, %c0_45], %79 {strides = array<i32>} : memref<16x32xf32, #tpu.memory_space<vmem>>, vector<16x32xf32>,
    } else {
    }
    %c0_38 = arith.constant 0 : index
    %c0_39 = arith.constant 0 : index
    %74 = vector.load %arg7[%c0_38, %c0_39] : memref<16x32xf32, #tpu.memory_space<vmem>>, vector<16x32xf32>
    %75 = arith.addf %74, %70 : vector<16x32xf32>
    %c0_40 = arith.constant 0 : index
    %c0_41 = arith.constant 0 : index
    %76 = vector.load %arg7[%c0_40, %c0_41] : memref<16x32xf32, #tpu.memory_space<vmem>>, vector<16x32xf32>
    tpu.vector_store %arg7[%c0_40, %c0_41], %75 {strides = array<i32>} : memref<16x32xf32, #tpu.memory_space<vmem>>, vector<16x32xf32>,
    return
  }
  func.func @transform_0(%arg0: i32, %arg1: i32) -> (i32, i32) {
    %c0_i32 = arith.constant 0 : i32
    %c0_i32_0 = arith.constant 0 : i32
    return %arg0, %c0_i32 : i32, i32
  }
  func.func @transform_1(%arg0: i32, %arg1: i32) -> (i32, i32, i32) {
    %c0_i32 = arith.constant 0 : i32
    %c0_i32_0 = arith.constant 0 : i32
    %c0_i32_1 = arith.constant 0 : i32
    return %arg1, %c0_i32, %c0_i32_0 : i32, i32, i32
  }
  func.func @transform_2(%arg0: i32, %arg1: i32) -> (i32, i32) {
    %c0_i32 = arith.constant 0 : i32
    %c0_i32_0 = arith.constant 0 : i32
    return %c0_i32, %arg1 : i32, i32
  }
  func.func @transform_3(%arg0: i32, %arg1: i32) -> (i32, i32) {
    %c0_i32 = arith.constant 0 : i32
    %c0_i32_0 = arith.constant 0 : i32
    return %arg1, %c0_i32 : i32, i32
  }
  func.func @transform_4(%arg0: i32, %arg1: i32) -> (i32, i32) {
    %c0_i32 = arith.constant 0 : i32
    %c0_i32_0 = arith.constant 0 : i32
    %c0_i32_1 = arith.constant 0 : i32
    return %c0_i32, %c0_i32_0 : i32, i32
  }
  func.func @transform_5(%arg0: i32, %arg1: i32) -> (i32, i32) {
    %c0_i32 = arith.constant 0 : i32
    %c0_i32_0 = arith.constant 0 : i32
    return %arg0, %c0_i32 : i32, i32
  }
  func.func @transform_6(%arg0: i32, %arg1: i32) -> (i32, i32, i32) {
    %c0_i32 = arith.constant 0 : i32
    %c0_i32_0 = arith.constant 0 : i32
    return %arg0, %c0_i32, %arg1 : i32, i32, i32
  }
}

</mosaic_0001>

<llo_original>
// kernel: _phi_mlp_call.1
$region0: #{_phi_mlp_call.1}
  #allocation0 [shape = 'u32[]', space=smem, size = 0x4, offset = 0x4, fixed_abs, tag = 'smem constant byte address 0x4 - core index']
  #allocation1 [shape = 'u32[144,128]{1,0:T(1,128)}', space=vmem, size = 0x12000, scoped, tag = 'internal scratch']
  %s0 = inlined_call_operand.vmem [shape: bf16[16,32], index: 0, kind: input, shape index: {}]
  %s1 = inlined_call_operand.vmem [shape: bf16[1,32,64], index: 1, kind: input, shape index: {}]
  %s2 = inlined_call_operand.vmem [shape: f32[1,64], index: 2, kind: input, shape index: {}]
  %s3 = inlined_call_operand.vmem [shape: bf16[64,32], index: 3, kind: input, shape index: {}]
  %s4 = inlined_call_operand.vmem [shape: f32[1,32], index: 4, kind: input, shape index: {}]
  %s5 = inlined_call_operand.hbm [shape: f32[16,32], index: 5, kind: output, shape index: {0}]
  %s6 = inlined_call_operand.vmem [shape: f32[1,4,64], index: 6, kind: output, shape index: {1}]
  %7 = xla_tuple %s5, %s6
  %s8 = sld [smem:[#allocation0]]
  $region42: #{_phi_mlp_call.1} parent=0
    _
  %s10 = ssub.s32 1, %s8
  %s11 = scalar_select 0, %s10, %s8
  $region1: #{_phi_mlp_call.1} parent=0
    #allocation2 [shape = 'u8[8192]{0}', space=vmem, size = 0x2000, scoped, tag = 'output window, operand 0, single buffered']
    #allocation3 [shape = 's32[1]{0}', space=sflag, size = 0x4, scoped, tag = 'scoped memory for _phi_mlp_call.1']
    %12 = vsyncpa [#allocation3], 0
    // Predicated region
    $region2: #{_phi_mlp_call.1} parent=1 // pred_check
      _
    $region3: #{_phi_mlp_call.1} parent=1 // pred_check_branch
      %14 = sbr.rel (0) target = $region5
    $region4: #{_phi_mlp_call.1} parent=1 // pred_region
      _
    $region5: #{_phi_mlp_call.1} parent=1 // pred_fallthru
      _
    // Predicated region
    $region6: #{_phi_mlp_call.1} parent=1 // pred_check
      _
    $region7: #{_phi_mlp_call.1} parent=1 // pred_check_branch
      %16 = sbr.rel (0) target = $region9
    $region8: #{_phi_mlp_call.1} parent=1 // pred_region
      _
    $region9: #{_phi_mlp_call.1} parent=1 // pred_fallthru
      _
    // Predicated region
    $region10: #{_phi_mlp_call.1} parent=1 // pred_check
      _
    $region11: #{_phi_mlp_call.1} parent=1 // pred_check_branch
      %18 = sbr.rel (0) target = $region13
    $region12: #{_phi_mlp_call.1} parent=1 // pred_region
      _
    $region13: #{_phi_mlp_call.1} parent=1 // pred_fallthru
      _
    // Predicated region
    $region14: #{_phi_mlp_call.1} parent=1 // pred_check
      _
    $region15: #{_phi_mlp_call.1} parent=1 // pred_check_branch
      %20 = sbr.rel (0) target = $region17
    $region16: #{_phi_mlp_call.1} parent=1 // pred_region
      _
    $region17: #{_phi_mlp_call.1} parent=1 // pred_fallthru
      _
    // Predicated region
    $region18: #{_phi_mlp_call.1} parent=1 // pred_check
      _
    $region19: #{_phi_mlp_call.1} parent=1 // pred_check_branch
      %22 = sbr.rel (0) target = $region21
    $region20: #{_phi_mlp_call.1} parent=1 // pred_region
      _
    $region21: #{_phi_mlp_call.1} parent=1 // pred_fallthru
      _
    %v24 = vld [vmem:[%s0] sm:$0xf]
    %v25 = vld [vmem:[%s0 + $0x4] sm:$0xf]
    %v26 = vld [vmem:[%s1] sm:$0xf]
    %v27 = vld [vmem:[%s1 + $0x4] sm:$0xf]
    %v28 = vld [vmem:[%s1 + $0x8] sm:$0xf]
    %v29 = vld [vmem:[%s1 + $0xc] sm:$0xf]
    %v32 = vunpack.c.l.b16 %v24
    %v33 = vunpack.c.l.b16 %v25
    %v34 = vpack.c.b16 %v33, %v32
    %v39 = vunpack.c.l.b16 %v26
    %v40 = vunpack.c.l.b16 %v27
    %v41 = vunpack.c.l.b16 %v28
    %v42 = vunpack.c.l.b16 %v29
    %v43 = vpack.c.b16 %v40, %v39
    %v44 = vpack.c.b16 %v42, %v41
    %vm47 = vcmask 261120
    %v49 = vsel %vm47, %v34, 0
    %51 = vmatprep.subr.bf16.mxu0 0
    %52 = vmatpush1.bf16.msra.mxu0 0
    %53 = vmatprep.subr.bf16.mxu0 0
    %54 = vmatpush1.bf16.msra.mxu0 0
    %55 = vmatprep.subr.bf16.mxu0 0
    %56 = vmatpush1.bf16.msra.mxu0 0
    %57 = vmatprep.subr.bf16.mxu0 0
    %58 = vmatpush1.bf16.msra.mxu0 0
    %59 = vmatprep.subr.bf16.mxu0 0
    %60 = vmatpush1.bf16.msra.mxu0 0
    %61 = vmatprep.subr.bf16.mxu0 0
    %62 = vmatpush1.bf16.msra.mxu0 0
    %63 = vmatprep.subr.bf16.mxu0 0
    %64 = vmatpush1.bf16.msra.mxu0 %v44
    %65 = vmatprep.subr.bf16.mxu0 0
    %66 = vmatpush1.bf16.msra.mxu0 %v43
    %67 = vmatprep.subr.bf16.mxu0 0
    %68 = vmatpush2.bf16.msra.mxu0 0
    %69 = vmatprep.subr.bf16.mxu0 0
    %70 = vmatpush2.bf16.msra.mxu0 0
    %71 = vmatprep.subr.bf16.mxu0 0
    %72 = vmatpush2.bf16.msra.mxu0 0
    %73 = vmatprep.subr.bf16.mxu0 0
    %74 = vmatpush2.bf16.msra.mxu0 0
    %75 = vmatprep.subr.bf16.mxu0 0
    %76 = vmatpush2.bf16.msra.mxu0 0
    %77 = vmatprep.subr.bf16.mxu0 0
    %78 = vmatpush2.bf16.msra.mxu0 0
    %79 = vmatprep.subr.bf16.mxu0 0
    %80 = vmatpush2.bf16.msra.mxu0 0
    %81 = vmatprep.subr.bf16.mxu0 0
    %82 = vmatpush2.bf16.msra.mxu0 0
    %83 = vmatprep.mubr.bf16.mxu0 0
    %84 = vmatmul.mubr.bf16.gmra.mxu0 %v49
    %v85 = vpop.f32.mrf.mxu0
    %v86 = vadd.f32 0.0, %v85
    %v87 = vpop.f32.mrf.mxu0
    %v88 = vpop.f32.mrf.mxu0
    %v89 = vadd.f32 0.0, %v88
    %v90 = vpop.f32.mrf.mxu0
    %91 = vdwg.mxu0
    %vm92 = vcmask 523264
    %v93 = vsel %vm92, %v86, 0.0
    %v94 = vsel %vm92, %v89, 0.0
    %v95 = vadd.f32 %v93, %v94
    %v96 = vrot.slane %v95, 4
    %v97 = vadd.f32 %v95, %v96
    %v98 = vrot.slane %v97, 2
    %v99 = vadd.f32 %v97, %v98
    %v100 = vrot.slane %v99, 1
    %v101 = vadd.f32 %v99, %v100
    %vm102 = vcmask 516096
    %103 = vst.msk [vmem:[%s6] sm:$0x1] %vm102, %v101
    %v104 = vmul.f32 %v86, %v86
    %v105 = vmul.f32 %v89, %v89
    %v106 = vsel %vm92, %v104, 0.0
    %v107 = vsel %vm92, %v105, 0.0
    %v108 = vadd.f32 %v106, %v107
    %v109 = vrot.slane %v108, 4
    %v110 = vadd.f32 %v108, %v109
    %v111 = vrot.slane %v110, 2
    %v112 = vadd.f32 %v110, %v111
    %v113 = vrot.slane %v112, 1
    %v114 = vadd.f32 %v112, %v113
    %115 = vst.msk [vmem:[%s6 + $0x1] sm:$0x1] %vm102, %v114
    %v116 = vsel %vm92, %v86, -inf
    %v117 = vsel %vm92, %v89, -inf
    %v118 = vmax.f32 %v116, %v117
    %v119 = vrot.slane %v118, 4
    %v120 = vmax.f32 %v118, %v119
    %v121 = vrot.slane %v120, 2
    %v122 = vmax.f32 %v120, %v121
    %v123 = vrot.slane %v122, 1
    %v124 = vmax.f32 %v122, %v123
    %125 = vst.msk [vmem:[%s6 + $0x2] sm:$0x1] %vm102, %v124
    %v126 = vsel %vm92, %v86, inf
    %v127 = vsel %vm92, %v89, inf
    %v128 = vmin.f32 %v126, %v127
    %v129 = vrot.slane %v128, 4
    %v130 = vmin.f32 %v128, %v129
    %v131 = vrot.slane %v130, 2
    %v132 = vmin.f32 %v130, %v131
    %v133 = vrot.slane %v132, 1
    %v134 = vmin.f32 %v132, %v133
    %135 = vst.msk [vmem:[%s6 + $0x3] sm:$0x1] %vm102, %v134
    %v136 = vld [vmem:[%s2] sm:$0x1]
    %v138 = vlaneseq
    %v139 = vshrl.u32 %v138, 7
    %v140 = vsub.s32 0, %v139
    %v141 = vrot.slane %v136, %v140
    %v143 = vadd.f32 %v86, %v141
    %v144 = vadd.f32 %v89, %v141
    %v145 = vmul.f32 %v143, 0.5
    %v146 = vmul.f32 %v144, 0.5
    %v147 = vrcp.pop 1.4142135
    %v148 = vmul.f32 %v143, %v147
    %v149 = vmul.f32 %v144, %v147
    %vm150 = vcmp.ge.f32.partialorder %v148, 0.0
    %vm151 = vcmp.ge.f32.partialorder %v149, 0.0
    %v152 = vsel %vm150, 1.0, -1.0
    %v153 = vsel %vm151, 1.0, -1.0
    %v154 = vand.u32 2147483647, %v148
    %v155 = vand.u32 2147483647, %v149
    %v156 = vmul.f32 %v154, 0.3275911
    %v157 = vmul.f32 %v155, 0.3275911
    %v158 = vadd.f32 %v156, 1.0
    %v159 = vadd.f32 %v157, 1.0
    %v160 = vrcp.pop %v158
    %v161 = vrcp.pop %v159
    %v162 = vmul.f32 %v160, 1.0614054
    %v163 = vmul.f32 %v161, 1.0614054
    %v164 = vadd.f32 %v162, -1.4531521
    %v165 = vadd.f32 %v163, -1.4531521
    %v166 = vmul.f32 %v164, %v160
    %v167 = vmul.f32 %v165, %v161
    %v168 = vadd.f32 %v166, 1.4214138
    %v169 = vadd.f32 %v167, 1.4214138
    %v170 = vmul.f32 %v168, %v160
    %v171 = vmul.f32 %v169, %v161
    %v172 = vadd.f32 %v170, -0.28449672
    %v173 = vadd.f32 %v171, -0.28449672
    %v174 = vmul.f32 %v172, %v160
    %v175 = vmul.f32 %v173, %v161
    %v176 = vadd.f32 %v174, 0.2548296
    %v177 = vadd.f32 %v175, 0.2548296
    %v178 = vmul.f32 %v176, %v160
    %v179 = vmul.f32 %v177, %v161
    %v180 = vsub.f32 0.0, %v154
    %v181 = vsub.f32 0.0, %v155
    %v182 = vmul.f32 %v180, %v154
    %v183 = vmul.f32 %v181, %v155
    %v184 = vmul.f32 %v182, 1.442695
    %v185 = vpow.pop %v184
    %v186 = vmul.f32 %v183, 1.442695
    %v187 = vpow.pop %v186
    %v188 = vmul.f32 %v178, %v185
    %v189 = vmul.f32 %v179, %v187
    %v190 = vsub.f32 1.0, %v188
    %v191 = vsub.f32 1.0, %v189
    %v192 = vmul.f32 %v152, %v190
    %v193 = vmul.f32 %v153, %v191
    %v194 = vadd.f32 %v192, 1.0
    %v195 = vadd.f32 %v193, 1.0
    %v196 = vmul.f32 %v145, %v194
    %v197 = vmul.f32 %v146, %v195
    %v198 = vpack.c.bf16 %v197, %v196
    %v199 = vld [vmem:[%s3] sm:$0xf]
    %v200 = vld [vmem:[%s3 + $0x4] sm:$0xf]
    %v201 = vld [vmem:[%s3 + $0x8] sm:$0xf]
    %v202 = vld [vmem:[%s3 + $0xc] sm:$0xf]
    %v203 = vld [vmem:[%s3 + $0x10] sm:$0xf]
    %v204 = vld [vmem:[%s3 + $0x14] sm:$0xf]
    %v205 = vld [vmem:[%s3 + $0x18] sm:$0xf]
    %v206 = vld [vmem:[%s3 + $0x1c] sm:$0xf]
    %v215 = vunpack.c.l.b16 %v199
    %v216 = vunpack.c.l.b16 %v200
    %v217 = vunpack.c.l.b16 %v201
    %v218 = vunpack.c.l.b16 %v202
    %v219 = vunpack.c.l.b16 %v203
    %v220 = vunpack.c.l.b16 %v204
    %v221 = vunpack.c.l.b16 %v205
    %v222 = vunpack.c.l.b16 %v206
    %v223 = vpack.c.b16 %v216, %v215
    %v224 = vpack.c.b16 %v218, %v217
    %v225 = vpack.c.b16 %v220, %v219
    %v226 = vpack.c.b16 %v222, %v221
    %v232 = vsel %vm92, %v198, 0
    %234 = vmatprep.subr.bf16.mxu0 0
    %235 = vmatpush1.bf16.msra.mxu0 0
    %236 = vmatprep.subr.bf16.mxu0 0
    %237 = vmatpush1.bf16.msra.mxu0 0
    %238 = vmatprep.subr.bf16.mxu0 0
    %239 = vmatpush1.bf16.msra.mxu0 0
    %240 = vmatprep.subr.bf16.mxu0 0
    %241 = vmatpush1.bf16.msra.mxu0 0
    %242 = vmatprep.subr.bf16.mxu0 0
    %243 = vmatpush1.bf16.msra.mxu0 %v226
    %244 = vmatprep.subr.bf16.mxu0 0
    %245 = vmatpush1.bf16.msra.mxu0 %v225
    %246 = vmatprep.subr.bf16.mxu0 0
    %247 = vmatpush1.bf16.msra.mxu0 %v224
    %248 = vmatprep.subr.bf16.mxu0 0
    %249 = vmatpush1.bf16.msra.mxu0 %v223
    %250 = vmatprep.subr.bf16.mxu0 0
    %251 = vmatpush2.bf16.msra.mxu0 0
    %252 = vmatprep.subr.bf16.mxu0 0
    %253 = vmatpush2.bf16.msra.mxu0 0
    %254 = vmatprep.subr.bf16.mxu0 0
    %255 = vmatpush2.bf16.msra.mxu0 0
    %256 = vmatprep.subr.bf16.mxu0 0
    %257 = vmatpush2.bf16.msra.mxu0 0
    %258 = vmatprep.subr.bf16.mxu0 0
    %259 = vmatpush2.bf16.msra.mxu0 0
    %260 = vmatprep.subr.bf16.mxu0 0
    %261 = vmatpush2.bf16.msra.mxu0 0
    %262 = vmatprep.subr.bf16.mxu0 0
    %263 = vmatpush2.bf16.msra.mxu0 0
    %264 = vmatprep.subr.bf16.mxu0 0
    %265 = vmatpush2.bf16.msra.mxu0 0
    %266 = vmatprep.mubr.bf16.mxu0 0
    %267 = vmatmul.mubr.bf16.gmra.mxu0 %v232
    %v268 = vpop.f32.mrf.mxu0
    %v269 = vadd.f32 0.0, %v268
    %v270 = vpop.f32.mrf.mxu0
    %v271 = vpop.f32.mrf.mxu0
    %v272 = vadd.f32 0.0, %v271
    %v273 = vpop.f32.mrf.mxu0
    %274 = vdwg.mxu0
    %p275 = scmp.eq.s32.totalorder 0, 0
    // Predicated region
    $region22: #{_phi_mlp_call.1} parent=1 // pred_check
      %p276 = pneg %p275
    $region23: #{_phi_mlp_call.1} parent=1 // pred_check_branch
      %278 = sbr.rel (%p276) target = $region25
    $region24: #{_phi_mlp_call.1} parent=1 // pred_region
      %v279 = vld [vmem:[%s4] sm:$0x1]
      %v281 = vlaneseq
      %v282 = vshrl.u32 %v281, 7
      %v283 = vsub.s32 0, %v282
      %v284 = vrot.slane %v279, %v283
      %286 = vst.msk [vmem:[#allocation2] sm:$0xff] %vm47, %v284
      %287 = vst.msk [vmem:[#allocation2 + $0x8] sm:$0xff] %vm47, %v284
    $region25: #{_phi_mlp_call.1} parent=1 // pred_fallthru
      _
    %v288 = vld [vmem:[#allocation2] sm:$0xff]
    %v289 = vld [vmem:[#allocation2 + $0x8] sm:$0xff]
    %v290 = vadd.f32 %v288, %v269
    %v291 = vadd.f32 %v289, %v272
    %292 = vst.msk [vmem:[#allocation2] sm:$0xff] %vm47, %v290
    %293 = vst.msk [vmem:[#allocation2 + $0x8] sm:$0xff] %vm47, %v291
    // Predicated region
    $region26: #{_phi_mlp_call.1} parent=1 // pred_check
      _
    $region27: #{_phi_mlp_call.1} parent=1 // pred_check_branch
      %295 = sbr.rel (0) target = $region29
    $region28: #{_phi_mlp_call.1} parent=1 // pred_region
      %s297 = ssub.s32 256, 256
      %298 = vsyncadd [#allocation3], %s297
      %s299 = sshll.u32 [#allocation2], 4
      %s300 = int_to_ptr.vmem [resolvable:$true] %s299
      %305 = dma.vmem_to_hbm [thread:$0]  %s300, 256, %s5, [#allocation3], 128, 128, 8
    $region29: #{_phi_mlp_call.1} parent=1 // pred_fallthru
      _
    // Predicated region
    $region30: #{_phi_mlp_call.1} parent=1 // pred_check
      _
    $region31: #{_phi_mlp_call.1} parent=1 // pred_check_branch
      %307 = sbr.rel (0) target = $region33
    $region32: #{_phi_mlp_call.1} parent=1 // pred_region
      _
    $region33: #{_phi_mlp_call.1} parent=1 // pred_fallthru
      _
    // Predicated region
    $region34: #{_phi_mlp_call.1} parent=1 // pred_check
      _
    $region35: #{_phi_mlp_call.1} parent=1 // pred_check_branch
      %309 = sbr.rel (0) target = $region37
    $region36: #{_phi_mlp_call.1} parent=1 // pred_region
      %310 = dma.done [#allocation3], 256
    $region37: #{_phi_mlp_call.1} parent=1 // pred_fallthru
      _
    // Predicated region
    $region38: #{_phi_mlp_call.1} parent=1 // pred_check
      _
    $region39: #{_phi_mlp_call.1} parent=1 // pred_check_branch
      %312 = sbr.rel (0) target = $region41
    $region40: #{_phi_mlp_call.1} parent=1 // pred_region
      _
    $region41: #{_phi_mlp_call.1} parent=1 // pred_fallthru
      _
    %313 = vsyncpa [#allocation3], 1

</llo_original>
